<compile_context>
chip_gen: v6e
topology: v6e:2x2x1
jax: 0.10.0
libtpu: 0.0.40
codegen_flags: <defaults>
</compile_context>

<pallas_src>
import math

import jax
import jax.numpy as jnp
import numpy as np
from jax.experimental import pallas as pl
from jax.experimental.pallas import tpu as pltpu

_LANE = 128
_SUBLANE = 8


# ------------------------------- Pallas kernel -------------------------------

def _make_embed_kernel(c_rows, use_vpu, w_cols):
    """o = x @ W + C, where C tiles every `c_rows` rows of the block."""

    def kernel(x_ref, w_ref, c_ref, o_ref):
        if use_vpu:
            # Tiny contraction (a handful of columns): rank-1 VPU accumulation keeps
            # the MXU/MRF idle; the kernel is HBM-bound so VALU slack is free.
            x = x_ref[...].astype(jnp.float32)
            w = w_ref[...]
            acc = x[:, 0:1] * w[0:1, :]
            for wi in range(1, w_cols):
                acc = acc + x[:, wi:wi + 1] * w[wi:wi + 1, :]
        else:
            acc = jnp.dot(x_ref[...].astype(jnp.float32), w_ref[...],
                          preferred_element_type=jnp.float32)
        br, d = o_ref.shape
        if c_rows == br:
            acc = acc + c_ref[...]
        else:
            # c_rows is a multiple of 8, so this reshape keeps (8,128) tiles intact.
            acc = (acc.reshape(br // c_rows, c_rows, d)
                   + c_ref[...][None, :, :]).reshape(br, d)
        o_ref[...] = acc.astype(o_ref.dtype)

    return kernel


# ------------------------------ trace-time glue ------------------------------

def make_positional_encoding(length, d_model):
    """PositionalEmbeddingnew._create_positional_encoding (values for the first
    `length` positions are identical across hierarchical levels)."""
    position = jnp.arange(length, dtype=jnp.float32)[:, None]
    div_term = jnp.exp(
        jnp.arange(0, d_model, 2, dtype=jnp.float32) * -(math.log(10000.0) / d_model))
    pe = jnp.zeros((length, d_model), dtype=jnp.float32)
    pe = pe.at[:, 0::2].set(jnp.sin(position * div_term))
    pe = pe.at[:, 1::2].set(jnp.cos(position * div_term))
    return pe


def _fold_parameters(params, *, patch_len, stride, num_patches, hierarchical_levels):
    """Fold Linear + PE + all Conv1d(k=2, s=2) merge levels into (W_win, C).

    W_win rows are zero-padded up to a multiple of 8 sublanes (clean vreg packing).
    Both W_win and C are kept in f32 (folded products lose more precision in bf16
    than the original sequential computation; the RHS is tiny so this is free).
    """
    w_value = params["w_value"].astype(jnp.float32)          # [D, P] (torch Linear layout)
    d_model = w_value.shape[0]
    g = 2 ** (hierarchical_levels - 1)

    # Per-group matrices: final[t] = sum_j emb[g*t + j] @ Ms[j] + c_total
    Ms = [jnp.eye(d_model, dtype=jnp.float32)]
    c_total = jnp.zeros((d_model,), jnp.float32)
    for k in range(hierarchical_levels - 1):
        w_conv = params["conv_w"][k].astype(jnp.float32)      # [D, D, 2]
        b_conv = params["conv_b"][k].astype(jnp.float32)      # [D]
        a0, a1 = w_conv[:, :, 0].T, w_conv[:, :, 1].T
        Ms = [m @ a0 for m in Ms] + [m @ a1 for m in Ms]
        c_total = c_total @ a0 + c_total @ a1 + b_conv

    # Fold the value embedding in, then collapse overlapping patch positions into
    # per-window-position weights (overlaps just add).  Pad rows to a sublane multiple.
    wv_t = w_value.T                                          # [P, D]
    w_fold = [wv_t @ m for m in Ms]                           # g x [P, D]
    window_len = (g - 1) * stride + patch_len
    w_pad = -(-window_len // _SUBLANE) * _SUBLANE
    w_win = jnp.zeros((w_pad, d_model), jnp.float32)
    for j in range(g):
        w_win = w_win.at[j * stride: j * stride + patch_len].add(w_fold[j])

    # Constant table: PE pushed through the merge chain + accumulated conv biases.
    n_out = num_patches // g
    pe = make_positional_encoding(num_patches, d_model)       # [N, D]
    pe_g = pe[: g * n_out].reshape(n_out, g, d_model)
    c_table = c_total[None, :] + sum(pe_g[:, j, :] @ Ms[j] for j in range(g))

    return w_win, c_table.astype(jnp.float32), n_out, window_len, w_pad


def _choose_block_rows(R, n_out, row_align, target_rows, vmem_block_budget, per_row_bytes):
    """Rows per grid step: multiple of lcm(n_out, row_align) (bias pattern + sublane
    alignment), capped by the VMEM budget, and split so the grid has >= 2 steps
    whenever possible (v7x: both TensorCores get work; everywhere: pipelining)."""
    unit = (n_out * row_align) // math.gcd(n_out, row_align)
    max_rows = max(unit, min(target_rows, vmem_block_budget // max(per_row_bytes, 1)))
    br = max(unit, (max_rows // unit) * unit)
    if br >= R:
        half = -(-((R + 1) // 2) // unit) * unit
        br = half if half < R else R          # full-extent block only for tiny problems
    return br


# ---------------------------------- wrapper ----------------------------------

def advanced_patch_embedding(x, params, *, patch_len, stride, padding,
                             hierarchical_levels, block_rows=4096,
                             vmem_block_budget=20 * 1024 * 1024,
                             matmul_backend="auto"):
    """Forward pass of AdvancedPatchEmbedding (merge_method='conv', eval mode).

    x: [B, n_vars, L]  ->  ([B*n_vars, N // 2**(levels-1), d_model], n_vars)
    """
    B, n_vars, L = x.shape
    M = B * n_vars
    x2 = x.reshape(M, L)

    # ReplicationPad1d((0, padding)): repeat the last time step on the right.
    if padding > 0:
        x_pad = jnp.concatenate([x2, jnp.repeat(x2[:, -1:], padding, axis=1)], axis=1)
    else:
        x_pad = x2
    Lp = L + padding

    num_patches = (Lp - patch_len) // stride + 1
    g = 2 ** (hierarchical_levels - 1)

    w_win, c_table, n_out, window_len, w_pad = _fold_parameters(
        params, patch_len=patch_len, stride=stride, num_patches=num_patches,
        hierarchical_levels=hierarchical_levels)
    d_model = w_win.shape[1]
    assert n_out >= 1, "sequence too short for the requested hierarchy"

    # Overlapping windows win[m, t, w] = x_pad[m, S*t + w] built from contiguous
    # reshapes of the padded series.  Columns in [window_len, w_pad) hit zero rows
    # of W_win and come from finite replicated samples (never NaN/garbage).
    # TODO(synk): for deep hierarchies (large windows) this gather could move in-kernel
    # via shifted pl.ds slices of a raw padded-row slab to drop the win2 HBM round trip.
    S = g * stride
    Q = -(-w_pad // S)
    need = (n_out + Q - 1) * S
    if Lp < need:
        x_pad = jnp.concatenate(
            [x_pad, jnp.repeat(x_pad[:, -1:], need - Lp, axis=1)], axis=1)
    else:
        x_pad = x_pad[:, :need]
    pieces = []
    for q in range(Q):
        width = min(S, w_pad - q * S)
        chunk = x_pad[:, q * S:(q + n_out) * S].reshape(M, n_out, S)
        pieces.append(chunk[:, :, :width])
    win = pieces[0] if Q == 1 else jnp.concatenate(pieces, axis=-1)   # [M, n_out, Wp]
    win2 = win.reshape(M * n_out, w_pad)

    R = M * n_out
    in_item = jnp.dtype(win2.dtype).itemsize
    out_item = jnp.dtype(x.dtype).itemsize
    d_lanes = -(-d_model // _LANE) * _LANE
    row_align = _SUBLANE if out_item >= 4 else max(_SUBLANE, 32 // out_item)
    per_row_bytes = (2 * _LANE * in_item        # LHS block (lane-padded), double-buffered
                     + 2 * d_lanes * out_item   # output block, double-buffered
                     + d_lanes * 4)             # f32 accumulator temp
    BR = _choose_block_rows(R, n_out, row_align, block_rows,
                            vmem_block_budget, per_row_bytes)
    grid = pl.cdiv(R, BR)
    # TODO(synk): degenerate M=1 with huge n_out would additionally need blocking along
    # the patch axis; not needed for the shapes this module is used with.

    # Folded constant: keep only lcm(n_out, 8) rows resident and broadcast in-kernel,
    # instead of tiling it to BR rows in HBM/VMEM.
    c_rows = (n_out * _SUBLANE) // math.gcd(n_out, _SUBLANE)
    if BR % c_rows != 0:                 # tiny full-extent fallback block
        c_rows = BR
    c_in = jnp.tile(c_table, (c_rows // n_out, 1))                     # [c_rows, D] f32

    use_vpu = (matmul_backend == "vpu") or (matmul_backend == "auto" and w_pad <= 8)
    kernel = _make_embed_kernel(c_rows, use_vpu, w_pad)

    est_block_bytes = BR * per_row_bytes + (w_pad + c_rows) * d_lanes * 4
    vmem_limit = int(min(48 * 1024 * 1024, max(16 * 1024 * 1024, 2 * est_block_bytes)))

    cost = pl.CostEstimate(
        flops=2 * R * w_pad * d_model,
        transcendentals=0,
        bytes_accessed=(R * w_pad * in_item + w_pad * d_model * 4
                        + c_rows * d_model * 4 + R * d_model * out_item))

    out2 = pl.pallas_call(
        kernel,
        out_shape=jax.ShapeDtypeStruct((R, d_model), x.dtype),
        grid=(grid,),
        in_specs=[
            pl.BlockSpec((BR, w_pad), lambda i: (i, 0)),
            pl.BlockSpec((w_pad, d_model), lambda i: (0, 0)),
            pl.BlockSpec((c_rows, d_model), lambda i: (0, 0)),
        ],
        out_specs=pl.BlockSpec((BR, d_model), lambda i: (i, 0)),
        compiler_params=pltpu.CompilerParams(
            dimension_semantics=("parallel",),
            vmem_limit_bytes=vmem_limit),
        cost_estimate=cost,
    )(win2, w_win, c_in)

    # TODO(synk): nn.Dropout is identity in eval mode; no dropout applied here.
    return out2.reshape(M, n_out, d_model), n_vars


# --------------------------- pure-jnp reference path --------------------------

def _reference_forward(x, params, *, patch_len, stride, padding, hierarchical_levels):
    """Direct (unfolded) jnp mirror of the PyTorch module, for correctness checks."""
    B, n_vars, L = x.shape
    M = B * n_vars
    xr = x.reshape(M, L).astype(jnp.float32)
    if padding > 0:
        x_pad = jnp.concatenate([xr, jnp.repeat(xr[:, -1:], padding, axis=1)], axis=1)
    else:
        x_pad = xr
    Lp = L + padding
    N = (Lp - patch_len) // stride + 1
    idx = jnp.arange(N)[:, None] * stride + jnp.arange(patch_len)[None, :]
    patches = x_pad[:, idx]                                   # [M, N, P]

    w_v = params["w_value"].astype(jnp.float32)               # [D, P]
    pe = make_positional_encoding(N, w_v.shape[0])
    out = patches @ w_v.T + pe[None]                          # [M, N, D]

    for k in range(hierarchical_levels - 1):
        w_conv = params["conv_w"][k].astype(jnp.float32)      # [D, D, 2]
        b_conv = params["conv_b"][k].astype(jnp.float32)      # [D]
        n2 = out.shape[1] // 2
        out = (out[:, 0:2 * n2:2] @ w_conv[:, :, 0].T
               + out[:, 1:2 * n2:2] @ w_conv[:, :, 1].T
               + b_conv[None, None, :])
    return out, n_vars


# ------------------------------------ main ------------------------------------

if __name__ == "__main__":
    B, n_vars, L = 2, 4, 16
    d_model, patch_len, stride, padding = 128, 4, 2, 2

    key = jax.random.PRNGKey(0)
    kx, kp2, kp3 = jax.random.split(key, 3)
    x = jax.random.normal(kx, (B, n_vars, L), dtype=jnp.float32)

    def make_params(k, n_merge):
        ks = jax.random.split(k, 2 * n_merge + 1)
        w_value = 0.1 * jax.random.normal(ks[0], (d_model, patch_len), jnp.float32)
        conv_w = [0.05 * jax.random.normal(ks[1 + 2 * i], (d_model, d_model, 2), jnp.float32)
                  for i in range(n_merge)]
        conv_b = [0.05 * jax.random.normal(ks[2 + 2 * i], (d_model,), jnp.float32)
                  for i in range(n_merge)]
        return {"w_value": w_value, "conv_w": conv_w, "conv_b": conv_b}

    num_patches = (L + padding - patch_len) // stride + 1

    # f32 runs: levels=2 exercises the tiny-window VPU path (and, forced, the MXU path
    # with the in-kernel bias reshape); levels=3 exercises the MXU path on a wider window.
    configs = [
        (2, make_params(kp2, 1), "auto"),
        (2, make_params(kp2, 1), "mxu"),
        (3, make_params(kp3, 2), "auto"),
    ]
    for levels, params, backend in configs:
        out, nv = advanced_patch_embedding(
            x, params, patch_len=patch_len, stride=stride, padding=padding,
            hierarchical_levels=levels, matmul_backend=backend)
        out = jax.block_until_ready(out)
        ref, _ = _reference_forward(
            x, params, patch_len=patch_len, stride=stride, padding=padding,
            hierarchical_levels=levels)
        expected_n = num_patches // (2 ** (levels - 1))
        assert out.shape == (B * n_vars, expected_n, d_model), out.shape
        assert nv == n_vars
        np.testing.assert_allclose(np.asarray(out), np.asarray(ref), rtol=1e-4, atol=1e-4)

    # bf16 I/O path: bf16 LHS + bf16 output, f32 folded weights/constant, f32 accumulation.
    params2 = make_params(kp2, 1)
    out_bf16, _ = advanced_patch_embedding(
        x.astype(jnp.bfloat16), params2, patch_len=patch_len, stride=stride,
        padding=padding, hierarchical_levels=2)
    out_bf16 = jax.block_until_ready(out_bf16)
    ref2, _ = _reference_forward(
        x, params2, patch_len=patch_len, stride=stride, padding=padding,
        hierarchical_levels=2)
    np.testing.assert_allclose(np.asarray(out_bf16).astype(np.float32),
                               np.asarray(ref2), rtol=3e-2, atol=3e-2)

    print("KERNEL_OK")
</pallas_src>

<mosaic_0001>
module attributes {stable_mosaic.version = 11 : i64} {
  func.func @kernel(%arg0: i32, %arg1: memref<16x8xf32, #tpu.memory_space<vmem>>, %arg2: memref<8x128xf32, #tpu.memory_space<vmem>>, %arg3: memref<8x128xf32, #tpu.memory_space<vmem>>, %arg4: memref<16x128xf32, #tpu.memory_space<vmem>>) attributes {dimension_semantics = [#tpu.dimension_semantics<parallel>], iteration_bounds = array<i64: 2>, scalar_prefetch = 0 : i64, scratch_operands = 0 : i64, tpu.core_type = #tpu.core_type<tc>, window_params = [{transform_indices = @transform_0, window_bounds = array<i64: 16, 8>}, {pipeline_mode = #tpu.pipeline_mode<synchronous>, transform_indices = @transform_1, window_bounds = array<i64: 8, 128>}, {pipeline_mode = #tpu.pipeline_mode<synchronous>, transform_indices = @transform_2, window_bounds = array<i64: 8, 128>}, {transform_indices = @transform_3, window_bounds = array<i64: 16, 128>}]} {
    %c0 = arith.constant 0 : index
    %c0_0 = arith.constant 0 : index
    %0 = vector.load %arg1[%c0, %c0_0] : memref<16x8xf32, #tpu.memory_space<vmem>>, vector<16x8xf32>
    %c0_1 = arith.constant 0 : index
    %c0_2 = arith.constant 0 : index
    %1 = vector.load %arg2[%c0_1, %c0_2] : memref<8x128xf32, #tpu.memory_space<vmem>>, vector<8x128xf32>
    %2 = vector.extract_strided_slice %0 {offsets = [0, 0], sizes = [16, 1], strides = [1, 1]} : vector<16x8xf32> to vector<16x1xf32>
    %3 = vector.extract_strided_slice %1 {offsets = [0, 0], sizes = [1, 128], strides = [1, 1]} : vector<8x128xf32> to vector<1x128xf32>
    %4 = vector.broadcast %2 : vector<16x1xf32> to vector<16x128xf32>
    %5 = vector.broadcast %3 : vector<1x128xf32> to vector<16x128xf32>
    %6 = arith.mulf %4, %5 : vector<16x128xf32>
    %7 = vector.extract_strided_slice %0 {offsets = [0, 1], sizes = [16, 1], strides = [1, 1]} : vector<16x8xf32> to vector<16x1xf32>
    %8 = vector.extract_strided_slice %1 {offsets = [1, 0], sizes = [1, 128], strides = [1, 1]} : vector<8x128xf32> to vector<1x128xf32>
    %9 = vector.broadcast %7 : vector<16x1xf32> to vector<16x128xf32>
    %10 = vector.broadcast %8 : vector<1x128xf32> to vector<16x128xf32>
    %11 = arith.mulf %9, %10 : vector<16x128xf32>
    %12 = arith.addf %6, %11 : vector<16x128xf32>
    %13 = vector.extract_strided_slice %0 {offsets = [0, 2], sizes = [16, 1], strides = [1, 1]} : vector<16x8xf32> to vector<16x1xf32>
    %14 = vector.extract_strided_slice %1 {offsets = [2, 0], sizes = [1, 128], strides = [1, 1]} : vector<8x128xf32> to vector<1x128xf32>
    %15 = vector.broadcast %13 : vector<16x1xf32> to vector<16x128xf32>
    %16 = vector.broadcast %14 : vector<1x128xf32> to vector<16x128xf32>
    %17 = arith.mulf %15, %16 : vector<16x128xf32>
    %18 = arith.addf %12, %17 : vector<16x128xf32>
    %19 = vector.extract_strided_slice %0 {offsets = [0, 3], sizes = [16, 1], strides = [1, 1]} : vector<16x8xf32> to vector<16x1xf32>
    %20 = vector.extract_strided_slice %1 {offsets = [3, 0], sizes = [1, 128], strides = [1, 1]} : vector<8x128xf32> to vector<1x128xf32>
    %21 = vector.broadcast %19 : vector<16x1xf32> to vector<16x128xf32>
    %22 = vector.broadcast %20 : vector<1x128xf32> to vector<16x128xf32>
    %23 = arith.mulf %21, %22 : vector<16x128xf32>
    %24 = arith.addf %18, %23 : vector<16x128xf32>
    %25 = vector.extract_strided_slice %0 {offsets = [0, 4], sizes = [16, 1], strides = [1, 1]} : vector<16x8xf32> to vector<16x1xf32>
    %26 = vector.extract_strided_slice %1 {offsets = [4, 0], sizes = [1, 128], strides = [1, 1]} : vector<8x128xf32> to vector<1x128xf32>
    %27 = vector.broadcast %25 : vector<16x1xf32> to vector<16x128xf32>
    %28 = vector.broadcast %26 : vector<1x128xf32> to vector<16x128xf32>
    %29 = arith.mulf %27, %28 : vector<16x128xf32>
    %30 = arith.addf %24, %29 : vector<16x128xf32>
    %31 = vector.extract_strided_slice %0 {offsets = [0, 5], sizes = [16, 1], strides = [1, 1]} : vector<16x8xf32> to vector<16x1xf32>
    %32 = vector.extract_strided_slice %1 {offsets = [5, 0], sizes = [1, 128], strides = [1, 1]} : vector<8x128xf32> to vector<1x128xf32>
    %33 = vector.broadcast %31 : vector<16x1xf32> to vector<16x128xf32>
    %34 = vector.broadcast %32 : vector<1x128xf32> to vector<16x128xf32>
    %35 = arith.mulf %33, %34 : vector<16x128xf32>
    %36 = arith.addf %30, %35 : vector<16x128xf32>
    %37 = vector.extract_strided_slice %0 {offsets = [0, 6], sizes = [16, 1], strides = [1, 1]} : vector<16x8xf32> to vector<16x1xf32>
    %38 = vector.extract_strided_slice %1 {offsets = [6, 0], sizes = [1, 128], strides = [1, 1]} : vector<8x128xf32> to vector<1x128xf32>
    %39 = vector.broadcast %37 : vector<16x1xf32> to vector<16x128xf32>
    %40 = vector.broadcast %38 : vector<1x128xf32> to vector<16x128xf32>
    %41 = arith.mulf %39, %40 : vector<16x128xf32>
    %42 = arith.addf %36, %41 : vector<16x128xf32>
    %43 = vector.extract_strided_slice %0 {offsets = [0, 7], sizes = [16, 1], strides = [1, 1]} : vector<16x8xf32> to vector<16x1xf32>
    %44 = vector.extract_strided_slice %1 {offsets = [7, 0], sizes = [1, 128], strides = [1, 1]} : vector<8x128xf32> to vector<1x128xf32>
    %45 = vector.broadcast %43 : vector<16x1xf32> to vector<16x128xf32>
    %46 = vector.broadcast %44 : vector<1x128xf32> to vector<16x128xf32>
    %47 = arith.mulf %45, %46 : vector<16x128xf32>
    %48 = arith.addf %42, %47 : vector<16x128xf32>
    %49 = vector.shape_cast %48 : vector<16x128xf32> to vector<2x8x128xf32>
    %c0_3 = arith.constant 0 : index
    %c0_4 = arith.constant 0 : index
    %50 = vector.load %arg3[%c0_3, %c0_4] : memref<8x128xf32, #tpu.memory_space<vmem>>, vector<8x128xf32>
    %51 = vector.shape_cast %50 : vector<8x128xf32> to vector<1x8x128xf32>
    %52 = vector.broadcast %51 : vector<1x8x128xf32> to vector<2x8x128xf32>
    %53 = arith.addf %49, %52 : vector<2x8x128xf32>
    %54 = vector.shape_cast %53 : vector<2x8x128xf32> to vector<16x128xf32>
    %c0_5 = arith.constant 0 : index
    %c0_6 = arith.constant 0 : index
    %55 = vector.load %arg4[%c0_5, %c0_6] : memref<16x128xf32, #tpu.memory_space<vmem>>, vector<16x128xf32>
    tpu.vector_store %arg4[%c0_5, %c0_6], %54 {strides = array<i32>} : memref<16x128xf32, #tpu.memory_space<vmem>>, vector<16x128xf32>,
    return
  }
  func.func @transform_0(%arg0: i32) -> (i32, i32) {
    %c0_i32 = arith.constant 0 : i32
    %c0_i32_0 = arith.constant 0 : i32
    return %arg0, %c0_i32 : i32, i32
  }
  func.func @transform_1(%arg0: i32) -> (i32, i32) {
    %c0_i32 = arith.constant 0 : i32
    %c0_i32_0 = arith.constant 0 : i32
    %c0_i32_1 = arith.constant 0 : i32
    return %c0_i32, %c0_i32_0 : i32, i32
  }
  func.func @transform_2(%arg0: i32) -> (i32, i32) {
    %c0_i32 = arith.constant 0 : i32
    %c0_i32_0 = arith.constant 0 : i32
    %c0_i32_1 = arith.constant 0 : i32
    return %c0_i32, %c0_i32_0 : i32, i32
  }
  func.func @transform_3(%arg0: i32) -> (i32, i32) {
    %c0_i32 = arith.constant 0 : i32
    %c0_i32_0 = arith.constant 0 : i32
    return %arg0, %c0_i32 : i32, i32
  }
}

</mosaic_0001>

<llo_original>
// kernel: tpu_custom_call.1
$region0: #{tpu_custom_call.1}
  #allocation0 [shape = 'u32[]', space=smem, size = 0x4, offset = 0x4, fixed_abs, tag = 'smem constant byte address 0x4 - core index']
  #allocation1 [shape = 'u32[144,128]{1,0:T(1,128)}', space=vmem, size = 0x12000, scoped, tag = 'internal scratch']
  %s0 = inlined_call_operand.vmem [shape: f32[32,8], index: 0, kind: input, shape index: {}]
  %s1 = inlined_call_operand.vmem [shape: f32[8,128], index: 1, kind: input, shape index: {}]
  %s2 = inlined_call_operand.vmem [shape: f32[8,128], index: 2, kind: input, shape index: {}]
  %s3 = inlined_call_operand.hbm [shape: f32[32,128], index: 3, kind: output, shape index: {}]
  %s4 = sld [smem:[#allocation0]]
  $region45: #{tpu_custom_call.1} parent=0
    _
  %s6 = ssub.s32 1, %s4
  %s7 = scalar_select 0, %s6, %s4
  $region1: #{tpu_custom_call.1} parent=0
    #allocation2 [shape = 'u8[16384]{0}', space=vmem, size = 0x4000, scoped, tag = 'output window, operand 0']
    #allocation3 [shape = 's32[2]{0}', space=sflag, size = 0x8, scoped, tag = 'scoped memory for tpu_custom_call.1']
    %8 = vsyncpa [#allocation3], 0
    %s9 = scalar_lea.sflag [#allocation3], 1
    %10 = vsyncpa %s9, 0
    loop: start=0, step=1, limit=4
    $region2: #{tpu_custom_call.1} parent=1 // loop_pre_header
      _
    $region3: #{tpu_custom_call.1} parent=1 // loop_header
      %s12 = sphi 0, %s16
      %p13 = scmp.ge.s32.totalorder %s12, 4
      %s22 = sphi 0, %s24
      %s25 = sphi 0, %s22
      %s26 = sphi 0, %s25
      %s42 = sphi 0, %s26
      %s46 = sphi 0, %s46
      %s48 = sphi 0, %s46
      %s49 = sphi 0, %s48
      %s63 = sphi 0, %s49
      %s67 = sphi 0, %s67
      %s69 = sphi 0, %s67
      %s70 = sphi 0, %s69
      %s84 = sphi 0, %s70
      %s90 = sphi 0, %s92
      %s93 = sphi 0, %s90
      %s94 = sphi 0, %s93
      %s110 = sphi 0, %s94
    $region4: #{tpu_custom_call.1} parent=1 // loop_header_branch
      %15 = sbr.rel (%p13) target = $region8
    $region5: #{tpu_custom_call.1} parent=1 // loop_body
      %s17 = ssub.s32 %s12, 1
      %s18 = ssub.s32 %s12, 2
      %s19 = sadd.s32 %s12, 1
      %s20 = ssub.s32 %s12, %s19
      %p21 = scmp.eq.s32.totalorder %s20, 0
      %s23 = sadd.s32 %s22, 1
      %s24 = scalar_select %p21, %s22, %s23
      %p27 = pneg %p21
      %p28 = scmp.eq.s32.totalorder %s12, 1
      %p29 = por %p27, %p28
      %p30 = scmp.ne.s32.totalorder %s22, %s25
      %p31 = scmp.eq.s32.totalorder %s12, 0
      %p32 = por %p30, %p31
      %p33 = scmp.ne.s32.totalorder %s22, %s25
      %p34 = scmp.eq.s32.totalorder %s17, 1
      %p35 = por %p33, %p34
      %p36 = scmp.ne.s32.totalorder %s25, %s26
      %p37 = scmp.eq.s32.totalorder %s17, 0
      %p38 = por %p36, %p37
      %p39 = scmp.ne.s32.totalorder %s25, %s26
      %p40 = scmp.eq.s32.totalorder %s18, 1
      %p41 = por %p39, %p40
      %p43 = scmp.ne.s32.totalorder %s26, %s42
      %p44 = scmp.eq.s32.totalorder %s18, 0
      %p45 = por %p43, %p44
      %s47 = sadd.s32 %s46, 1
      %p50 = scmp.eq.s32.totalorder %s12, 1
      %p51 = scmp.ne.s32.totalorder %s46, %s48
      %p52 = scmp.eq.s32.totalorder %s12, 0
      %p53 = por %p51, %p52
      %p54 = scmp.ne.s32.totalorder %s46, %s48
      %p55 = scmp.eq.s32.totalorder %s17, 1
      %p56 = por %p54, %p55
      %p57 = scmp.ne.s32.totalorder %s48, %s49
      %p58 = scmp.eq.s32.totalorder %s17, 0
      %p59 = por %p57, %p58
      %p60 = scmp.ne.s32.totalorder %s48, %s49
      %p61 = scmp.eq.s32.totalorder %s18, 1
      %p62 = por %p60, %p61
      %p64 = scmp.ne.s32.totalorder %s49, %s63
      %p65 = scmp.eq.s32.totalorder %s18, 0
      %p66 = por %p64, %p65
      %s68 = sadd.s32 %s67, 1
      %p71 = scmp.eq.s32.totalorder %s12, 1
      %p72 = scmp.ne.s32.totalorder %s67, %s69
      %p73 = scmp.eq.s32.totalorder %s12, 0
      %p74 = por %p72, %p73
      %p75 = scmp.ne.s32.totalorder %s67, %s69
      %p76 = scmp.eq.s32.totalorder %s17, 1
      %p77 = por %p75, %p76
      %p78 = scmp.ne.s32.totalorder %s69, %s70
      %p79 = scmp.eq.s32.totalorder %s17, 0
      %p80 = por %p78, %p79
      %p81 = scmp.ne.s32.totalorder %s69, %s70
      %p82 = scmp.eq.s32.totalorder %s18, 1
      %p83 = por %p81, %p82
      %p85 = scmp.ne.s32.totalorder %s70, %s84
      %p86 = scmp.eq.s32.totalorder %s18, 0
      %p87 = por %p85, %p86
      %s88 = ssub.s32 %s12, %s19
      %p89 = scmp.eq.s32.totalorder %s88, 0
      %s91 = sadd.s32 %s90, 1
      %s92 = scalar_select %p89, %s90, %s91
      %p95 = pneg %p89
      %p96 = scmp.eq.s32.totalorder %s12, 1
      %p97 = por %p95, %p96
      %p98 = scmp.ne.s32.totalorder %s90, %s93
      %p99 = scmp.eq.s32.totalorder %s12, 0
      %p100 = por %p98, %p99
      %p101 = scmp.ne.s32.totalorder %s90, %s93
      %p102 = scmp.eq.s32.totalorder %s17, 1
      %p103 = por %p101, %p102
      %p104 = scmp.ne.s32.totalorder %s93, %s94
      %p105 = scmp.eq.s32.totalorder %s17, 0
      %p106 = por %p104, %p105
      %p107 = scmp.ne.s32.totalorder %s93, %s94
      %p108 = scmp.eq.s32.totalorder %s18, 1
      %p109 = por %p107, %p108
      %p111 = scmp.ne.s32.totalorder %s94, %s110
      %p112 = scmp.eq.s32.totalorder %s18, 0
      %p113 = por %p111, %p112
      %p114 = scmp.le.s32.totalorder 1, %s12
      %p115 = scmp.lt.s32.totalorder %s12, 3
      %p116 = pnand %p114, %p115
      %p117 = pneg %p116
      // Predicated region
      $region9: #{tpu_custom_call.1} parent=5 // pred_check
        _
      $region10: #{tpu_custom_call.1} parent=5 // pred_check_branch
        %119 = sbr.rel (%p116) target = $region12
      $region11: #{tpu_custom_call.1} parent=5 // pred_region
        %s120 = ssub.s32 %s12, 1
        // Predicated region
        $region13: #{tpu_custom_call.1} parent=11 // pred_check
          %p121 = pneg %p59
        $region14: #{tpu_custom_call.1} parent=11 // pred_check_branch
          %123 = sbr.rel (%p121) target = $region16
        $region15: #{tpu_custom_call.1} parent=11 // pred_region
          _
        $region16: #{tpu_custom_call.1} parent=11 // pred_fallthru
          _
        // Predicated region
        $region17: #{tpu_custom_call.1} parent=11 // pred_check
          %p124 = pneg %p80
        $region18: #{tpu_custom_call.1} parent=11 // pred_check_branch
          %126 = sbr.rel (%p124) target = $region20
        $region19: #{tpu_custom_call.1} parent=11 // pred_region
          _
        $region20: #{tpu_custom_call.1} parent=11 // pred_fallthru
          _
      $region12: #{tpu_custom_call.1} parent=5 // pred_fallthru
        _
      %p127 = scmp.lt.s32.totalorder %s12, 2
      // Predicated region
      $region21: #{tpu_custom_call.1} parent=5 // pred_check
        %p128 = pneg %p127
      $region22: #{tpu_custom_call.1} parent=5 // pred_check_branch
        %130 = sbr.rel (%p128) target = $region24
      $region23: #{tpu_custom_call.1} parent=5 // pred_region
        // Predicated region
        $region25: #{tpu_custom_call.1} parent=23 // pred_check
          %p131 = pneg %p32
        $region26: #{tpu_custom_call.1} parent=23 // pred_check_branch
          %133 = sbr.rel (%p131) target = $region28
        $region27: #{tpu_custom_call.1} parent=23 // pred_region
          %s134 = smul.u32 2, %s12
          %p135 = scmp.lt.s32.totalorder %s134, 3
          %s136 = scalar_select %p135, %s134, 3
          %s137 = smul.addr %s136, 8
          %s138 = scalar_lea.vmem %s0, %s137
          %s139 = smul.u32 2, %s12
        $region28: #{tpu_custom_call.1} parent=23 // pred_fallthru
          _
      $region24: #{tpu_custom_call.1} parent=5 // pred_fallthru
        _
      %p140 = scmp.le.s32.totalorder 1, %s12
      %p141 = scmp.lt.s32.totalorder %s12, 3
      %p142 = pnand %p140, %p141
      %p143 = pneg %p142
      // Predicated region
      $region29: #{tpu_custom_call.1} parent=5 // pred_check
        _
      $region30: #{tpu_custom_call.1} parent=5 // pred_check_branch
        %145 = sbr.rel (%p142) target = $region32
      $region31: #{tpu_custom_call.1} parent=5 // pred_region
        %s146 = ssub.s32 %s12, 1
        %s147 = smul.u32 2, %s17
        %p148 = scmp.lt.s32.totalorder %s147, 3
        %s149 = scalar_select %p148, %s147, 3
        %s150 = smul.addr %s149, 8
        %s151 = scalar_lea.vmem %s0, %s150
        %p152 = pneg %p38
        %p153 = pneg %p35
        %p154 = pneg %p59
        %p155 = pneg %p56
        %p156 = pneg %p80
        %p157 = pneg %p77
        %p158 = pneg %p106
        %p159 = pneg %p103
        %s160 = sand.u32 %s93, 1
        %s161 = scalar_lea.sflag [#allocation3], %s160
        %s162 = sand.u32 %s93, 1
        %s163 = smul.addr %s162, 16
        %s164 = scalar_lea.vmem [#allocation2], %s163
        %s165 = smul.u32 2, %s17
        %p166 = scmp.lt.s32.totalorder %s165, 3
        %s167 = scalar_select %p166, %s165, 3
        %s168 = smul.addr %s167, 8
        %s169 = scalar_lea.vmem %s0, %s168
        %s170 = smul.u32 2, %s17
        %s171 = smul.u32 2, %s17
        %v172 = vld [vmem:[%s169] sm:$0xff]
        %v173 = vld [vmem:[%s169 + $0x8] sm:$0xff]
        %v174 = vld [vmem:[%s1] sm:$0xff]
        %176 = vset.pattern.permute.xlu0 0
        %177 = vperm.xlu0 %176, %v172
        %v178 = vpop.permute.xlu0 %177
        %181 = vset.pattern.permute.xlu0 0
        %182 = vperm.xlu0 %181, %v173
        %v183 = vpop.permute.xlu0 %182
        %v185 = vlaneseq
        %v186 = vshrl.u32 %v185, 7
        %v187 = vsub.s32 0, %v186
        %v188 = vrot.slane %v174, %v187
        %v189 = vmul.f32 %v178, %v188
        %v190 = vmul.f32 %v183, %v188
        %191 = vset.pattern.permute.xlu0 1
        %192 = vperm.xlu0 %191, %v172
        %v193 = vpop.permute.xlu0 %192
        %195 = vset.pattern.permute.xlu0 1
        %196 = vperm.xlu0 %195, %v173
        %v197 = vpop.permute.xlu0 %196
        %v199 = vlaneseq
        %v200 = vshrl.u32 %v199, 7
        %v201 = vsub.s32 1, %v200
        %v202 = vrot.slane %v174, %v201
        %v203 = vmul.f32 %v193, %v202
        %v204 = vmul.f32 %v197, %v202
        %v205 = vadd.f32 %v189, %v203
        %v206 = vadd.f32 %v190, %v204
        %207 = vset.pattern.permute.xlu0 2
        %208 = vperm.xlu0 %207, %v172
        %v209 = vpop.permute.xlu0 %208
        %211 = vset.pattern.permute.xlu0 2
        %212 = vperm.xlu0 %211, %v173
        %v213 = vpop.permute.xlu0 %212
        %v215 = vlaneseq
        %v216 = vshrl.u32 %v215, 7
        %v217 = vsub.s32 2, %v216
        %v218 = vrot.slane %v174, %v217
        %v219 = vmul.f32 %v209, %v218
        %v220 = vmul.f32 %v213, %v218
        %v221 = vadd.f32 %v205, %v219
        %v222 = vadd.f32 %v206, %v220
        %223 = vset.pattern.permute.xlu0 3
        %224 = vperm.xlu0 %223, %v172
        %v225 = vpop.permute.xlu0 %224
        %227 = vset.pattern.permute.xlu0 3
        %228 = vperm.xlu0 %227, %v173
        %v229 = vpop.permute.xlu0 %228
        %v231 = vlaneseq
        %v232 = vshrl.u32 %v231, 7
        %v233 = vsub.s32 3, %v232
        %v234 = vrot.slane %v174, %v233
        %v235 = vmul.f32 %v225, %v234
        %v236 = vmul.f32 %v229, %v234
        %v237 = vadd.f32 %v221, %v235
        %v238 = vadd.f32 %v222, %v236
        %239 = vset.pattern.permute.xlu0 4
        %240 = vperm.xlu0 %239, %v172
        %v241 = vpop.permute.xlu0 %240
        %243 = vset.pattern.permute.xlu0 4
        %244 = vperm.xlu0 %243, %v173
        %v245 = vpop.permute.xlu0 %244
        %v247 = vlaneseq
        %v248 = vshrl.u32 %v247, 7
        %v249 = vsub.s32 4, %v248
        %v250 = vrot.slane %v174, %v249
        %v251 = vmul.f32 %v241, %v250
        %v252 = vmul.f32 %v245, %v250
        %v253 = vadd.f32 %v237, %v251
        %v254 = vadd.f32 %v238, %v252
        %255 = vset.pattern.permute.xlu0 5
        %256 = vperm.xlu0 %255, %v172
        %v257 = vpop.permute.xlu0 %256
        %259 = vset.pattern.permute.xlu0 5
        %260 = vperm.xlu0 %259, %v173
        %v261 = vpop.permute.xlu0 %260
        %v263 = vlaneseq
        %v264 = vshrl.u32 %v263, 7
        %v265 = vsub.s32 5, %v264
        %v266 = vrot.slane %v174, %v265
        %v267 = vmul.f32 %v257, %v266
        %v268 = vmul.f32 %v261, %v266
        %v269 = vadd.f32 %v253, %v267
        %v270 = vadd.f32 %v254, %v268
        %271 = vset.pattern.permute.xlu0 6
        %272 = vperm.xlu0 %271, %v172
        %v273 = vpop.permute.xlu0 %272
        %275 = vset.pattern.permute.xlu0 6
        %276 = vperm.xlu0 %275, %v173
        %v277 = vpop.permute.xlu0 %276
        %v279 = vlaneseq
        %v280 = vshrl.u32 %v279, 7
        %v281 = vsub.s32 6, %v280
        %v282 = vrot.slane %v174, %v281
        %v283 = vmul.f32 %v273, %v282
        %v284 = vmul.f32 %v277, %v282
        %v285 = vadd.f32 %v269, %v283
        %v286 = vadd.f32 %v270, %v284
        %287 = vset.pattern.permute.xlu0 7
        %288 = vperm.xlu0 %287, %v172
        %v289 = vpop.permute.xlu0 %288
        %291 = vset.pattern.permute.xlu0 7
        %292 = vperm.xlu0 %291, %v173
        %v293 = vpop.permute.xlu0 %292
        %v295 = vlaneseq
        %v296 = vshrl.u32 %v295, 7
        %v297 = vsub.s32 7, %v296
        %v298 = vrot.slane %v174, %v297
        %v299 = vmul.f32 %v289, %v298
        %v300 = vmul.f32 %v293, %v298
        %v301 = vadd.f32 %v285, %v299
        %v302 = vadd.f32 %v286, %v300
        %v303 = vld [vmem:[%s2] sm:$0xff]
        %v304 = vadd.f32 %v301, %v303
        %v305 = vadd.f32 %v302, %v303
        %306 = vst [vmem:[%s164] sm:$0xff] %v304
        %307 = vst [vmem:[%s164 + $0x8] sm:$0xff] %v305
        %s308 = sand.u32 %s93, 1
        %s309 = scalar_lea.sflag [#allocation3], %s308
        %s310 = sand.u32 %s93, 1
        %s311 = smul.addr %s310, 16
        %s312 = scalar_lea.vmem [#allocation2], %s311
        // Predicated region
        $region33: #{tpu_custom_call.1} parent=31 // pred_check
          %p313 = pneg %p103
        $region34: #{tpu_custom_call.1} parent=31 // pred_check_branch
          %315 = sbr.rel (%p313) target = $region36
        $region35: #{tpu_custom_call.1} parent=31 // pred_region
          %s316 = smul.u32 2, %s17
          %s318 = ssub.s32 256, 256
          %319 = vsyncadd %s309, %s318
          %s320 = smul.addr %s316, 128
          %s321 = scalar_lea.hbm %s3, %s320
          %s322 = sshll.u32 %s312, 4
          %s323 = int_to_ptr.vmem [resolvable:$true] %s322
          %328 = dma.vmem_to_hbm [thread:$0]  %s323, 256, %s321, %s309, 128, 128, 8
        $region36: #{tpu_custom_call.1} parent=31 // pred_fallthru
          _
      $region32: #{tpu_custom_call.1} parent=5 // pred_fallthru
        _
      %p329 = scmp.le.s32.totalorder 2, %s12
      // Predicated region
      $region37: #{tpu_custom_call.1} parent=5 // pred_check
        %p330 = pneg %p329
      $region38: #{tpu_custom_call.1} parent=5 // pred_check_branch
        %332 = sbr.rel (%p330) target = $region40
      $region39: #{tpu_custom_call.1} parent=5 // pred_region
        %s333 = ssub.s32 %s12, 2
        // Predicated region
        $region41: #{tpu_custom_call.1} parent=39 // pred_check
          %p334 = pneg %p109
        $region42: #{tpu_custom_call.1} parent=39 // pred_check_branch
          %336 = sbr.rel (%p334) target = $region44
        $region43: #{tpu_custom_call.1} parent=39 // pred_region
          %s337 = sand.u32 %s94, 1
          %s338 = scalar_lea.sflag [#allocation3], %s337
          %s339 = sand.u32 %s94, 1
          %s340 = smul.addr %s339, 16
          %s341 = scalar_lea.vmem [#allocation2], %s340
          %342 = dma.done %s338, 256
        $region44: #{tpu_custom_call.1} parent=39 // pred_fallthru
          _
      $region40: #{tpu_custom_call.1} parent=5 // pred_fallthru
        _
    $region6: #{tpu_custom_call.1} parent=1 // loop_footer
      %s16 = sadd.s32 1, %s12
    $region7: #{tpu_custom_call.1} parent=1 // loop_footer_branch
      %11 = sbr.rel target = $region3
    $region8: #{tpu_custom_call.1} parent=1 // loop_exit
      _
    %343 = vsyncpa [#allocation3], 1
    %s344 = scalar_lea.sflag [#allocation3], 1
    %345 = vsyncpa %s344, 1

</llo_original>
